<compile_context>
chip_gen: v7x
topology: tpu7x:2x2x1
jax: 0.10.0
libtpu: 0.0.40
codegen_flags: <defaults>
</compile_context>

<pallas_src>
import functools

import numpy as np
import jax
import jax.numpy as jnp
from jax import lax
from jax.experimental import pallas as pl
from jax.experimental.pallas import tpu as pltpu


def _mhca_kernel(q_ref, feat_ref, meta_ref, wa_ref, ba_ref, woT_ref, bo_ref,
                 o_ref, acc_ref, *, H, W, hw_chunk):
    c = pl.program_id(2)                       # camera      (reduction axis)
    k = pl.program_id(3)                       # HW chunk    (reduction axis)
    num_cams = pl.num_programs(2)
    num_chunks = pl.num_programs(3)
    Kc = hw_chunk

    @pl.when((c == 0) & (k == 0))
    def _init():
        acc_ref[...] = jnp.zeros_like(acc_ref)

    q = q_ref[0]                                        # (tT, E)

    # attention_weights(query).sigmoid() -- only the column for camera c.
    wa_row = wa_ref[0]                                  # (1, E)
    ba_c = ba_ref[0]                                    # (1, 1)
    attn_c = jax.nn.sigmoid(
        jnp.sum(q * wa_row, axis=-1, keepdims=True) + ba_c)   # (tT, 1)

    meta = meta_ref[0, 0]                               # (tT, 4)
    gx = meta[:, 0:1]                                   # grid x -> width axis
    gy = meta[:, 1:2]                                   # grid y -> height axis
    keep = meta[:, 2:3]                                 # ~bounding

    # F.grid_sample(mode='bilinear', padding_mode='zeros', align_corners=True)
    ix = (gx + 1.0) * (0.5 * (W - 1))
    iy = (gy + 1.0) * (0.5 * (H - 1))
    ix0 = jnp.floor(ix)
    iy0 = jnp.floor(iy)
    fx = ix - ix0
    fy = iy - iy0
    ix0i = ix0.astype(jnp.int32)
    iy0i = iy0.astype(jnp.int32)

    # Per-corner validity (padding_mode='zeros').
    vx0 = ((ix0i >= 0) & (ix0i <= W - 1)).astype(jnp.float32)
    vx1 = ((ix0i >= -1) & (ix0i <= W - 2)).astype(jnp.float32)
    vy0 = ((iy0i >= 0) & (iy0i <= H - 1)).astype(jnp.float32)
    vy1 = ((iy0i >= -1) & (iy0i <= H - 2)).astype(jnp.float32)

    # Fold the out-of-bounds keep mask and the per-camera attention weight
    # directly into the (tT, 1) corner weights -> no (tT, E) post-scaling.
    scale = keep * attn_c

    # Flattened index of the base (top-left) corner; may fall outside [0, HW)
    # for out-of-image corners, but those always carry zero weight.
    idx0 = iy0i * W + ix0i                              # (tT, 1) int32
    base = k * Kc

    # Per-corner HW-chunk membership: each valid corner lands in exactly one
    # chunk, so the reduction over k reconstructs the full HW contraction.
    def member(off):
        ic = idx0 + off
        return ((ic >= base) & (ic < base + Kc)).astype(jnp.float32)

    w00 = (1.0 - fx) * (1.0 - fy) * vx0 * vy0 * scale * member(0)
    w01 = fx * (1.0 - fy) * vx1 * vy0 * scale * member(1)
    w10 = (1.0 - fx) * fy * vx0 * vy1 * scale * member(W)
    w11 = fx * fy * vx1 * vy1 * scale * member(W + 1)

    # One compare for the base corner; the other three corners are the same
    # one-hot rotated by +1 / +W / +W+1 lanes (XLU, off the VALU slot).
    # Wrapped positions only ever receive zero weight (masks above).
    idx_local = jnp.mod(idx0 - base, Kc)                # (tT, 1) in [0, Kc)
    iota = lax.broadcasted_iota(jnp.int32, (1, Kc), 1)  # (1, Kc) broadcast-compare
    oh = (iota == idx_local).astype(jnp.float32)        # (tT, Kc)

    # TODO(synk): on v6e/v7x build oh/S directly in bf16 (halves VALU passes
    # and vreg pressure) once bf16 lane rotates are confirmed to lower cleanly;
    # f32 build + single cast kept here for portability (v5e has no bf16 VPU).
    S = (w00 * oh
         + w01 * pltpu.roll(oh, shift=1, axis=1)
         + w10 * pltpu.roll(oh, shift=W, axis=1)
         + w11 * pltpu.roll(oh, shift=W + 1, axis=1))

    feat = feat_ref[0, 0]                               # (Kc, E) bf16 from HBM
    acc_ref[...] += jnp.dot(S.astype(jnp.bfloat16), feat,
                            preferred_element_type=jnp.float32)

    @pl.when((c == num_cams - 1) & (k == num_chunks - 1))
    def _finalize():
        # output_proj on the native bf16 MXU path (f32 accumulate);
        # Dropout(0.1) is identity in eval mode.
        out = jnp.dot(acc_ref[...].astype(jnp.bfloat16), woT_ref[...],
                      preferred_element_type=jnp.float32) + bo_ref[...]
        # TODO(synk): for production use E as a multiple of 128 so the output
        # store is lane-dense (unmasked vst) instead of masked partial stores.
        o_ref[0] = out.astype(o_ref.dtype)


def _pick_tile(n, max_tile):
    """Largest divisor of n that is <= max_tile and a multiple of 8, else n."""
    if n <= max_tile:
        return n
    start = max_tile - (max_tile % 8)
    for t in range(start, 7, -8):
        if n % t == 0:
            return t
    return n


def _vmem_limit_bytes(tT, Kc, E):
    feat_buf = Kc * E * 2                     # bf16 feature block
    q_buf = tT * E * 4
    meta_buf = tT * 128 * 4                   # 4-wide last dim pads to 128 lanes
    out_buf = tT * E * 4
    params = E * E * 2 + 2 * E * 4 + 512
    dbl = 2 * (feat_buf + q_buf + meta_buf + out_buf + params)   # double buffers
    work = tT * E * 4 + 6 * tT * Kc * 4       # f32 acc scratch + S/one-hot working set
    total = dbl + work
    return int(min(64 * 1024 * 1024, max(16 * 1024 * 1024, 2 * total)))


def mhca_pallas(query, feat_arr, meta_arr, wa_c1e, ba_c11, woT_bf16, bo, *, H, W,
                t_tile=None, hw_chunk=None):
    B, T, E = query.shape
    C = feat_arr.shape[0]
    HW = H * W
    tT = t_tile if t_tile is not None else _pick_tile(T, 256)
    Kc = hw_chunk if hw_chunk is not None else _pick_tile(HW, 2048)
    nT = T // tT
    nK = HW // Kc
    kernel = functools.partial(_mhca_kernel, H=H, W=W, hw_chunk=Kc)
    return pl.pallas_call(
        kernel,
        out_shape=jax.ShapeDtypeStruct((B, T, E), query.dtype),
        grid_spec=pltpu.PrefetchScalarGridSpec(
            num_scalar_prefetch=0,
            # Parallel (B, T-tile) axes leading; camera and HW-chunk reductions innermost.
            grid=(B, nT, C, nK),
            in_specs=[
                pl.BlockSpec((1, tT, E), lambda b, t, c, k: (b, t, 0)),          # query
                pl.BlockSpec((1, 1, Kc, E), lambda b, t, c, k: (c, b, k, 0)),    # features chunk (bf16)
                pl.BlockSpec((1, 1, tT, 4), lambda b, t, c, k: (c, b, t, 0)),    # grid/meta
                pl.BlockSpec((1, 1, E), lambda b, t, c, k: (c, 0, 0)),           # Wa row for camera c
                pl.BlockSpec((1, 1, 1), lambda b, t, c, k: (c, 0, 0)),           # ba for camera c
                pl.BlockSpec((E, E), lambda b, t, c, k: (0, 0)),                 # Wo^T (bf16)
                pl.BlockSpec((1, E), lambda b, t, c, k: (0, 0)),                 # bo
            ],
            out_specs=pl.BlockSpec((1, tT, E), lambda b, t, c, k: (b, t, 0)),
            scratch_shapes=[pltpu.VMEM((tT, E), jnp.float32)],                   # f32 accumulator
        ),
        compiler_params=pltpu.CompilerParams(
            dimension_semantics=("parallel", "parallel", "arbitrary", "arbitrary"),
            vmem_limit_bytes=_vmem_limit_bytes(tT, Kc, E)),
    )(query, feat_arr, meta_arr, wa_c1e, ba_c11, woT_bf16, bo)


def prepare_camera_inputs(anchor, features_list, cameras, pc_range):
    """Glue reproducing MHCA.forward's per-camera anchor scaling, projection
    ('capture'), bounding test and grid construction (including the in-loop
    anchor re-assignment of the reference code).  NOTE: mirrors the PyTorch
    module exactly, including its use of pixels[:,0] with H and pixels[:,1]
    with W for both the bounds check and the grid normalization.  Features are
    repacked channels-last and cast to bf16 (the MXU matmul already runs bf16,
    so this is numerically neutral and halves the HBM feature stream)."""
    B, T, _ = anchor.shape
    metas, feats = [], []
    anchor_cur = anchor
    for (M, t), features in zip(cameras, features_list):
        _, D, H, W = features.shape
        anchor_cur = anchor_cur * (pc_range[:, 1] - pc_range[:, 0]) + pc_range[:, 0]
        pts = anchor_cur.reshape(B * T, 3)
        pixels = pts @ M + t                      # deterministic "capture"
        bx = (pixels[:, 0] < 0) | (pixels[:, 0] > H)
        by = (pixels[:, 1] < 0) | (pixels[:, 1] > W)
        keep = 1.0 - (bx | by).astype(jnp.float32)
        gx = pixels[:, 0] / H
        gy = pixels[:, 1] / W
        meta = jnp.stack([gx, gy, keep, jnp.zeros_like(gx)], axis=-1)
        metas.append(meta.reshape(B, T, 4))
        feats.append(jnp.transpose(features, (0, 2, 3, 1))
                     .reshape(B, H * W, D).astype(jnp.bfloat16))
    return jnp.stack(metas, 0), jnp.stack(feats, 0)


def mhca_reference(query, features_list, meta_arr, waT, ba, woT, bo):
    """Pure-JAX f32 reference (grid_sample via gather) for correctness checking."""
    B, T, E = query.shape
    attn = jax.nn.sigmoid(query @ waT + ba)                       # (B, T, C)
    xs = []
    for c, features in enumerate(features_list):
        _, D, H, W = features.shape
        gx = meta_arr[c, ..., 0]
        gy = meta_arr[c, ..., 1]
        keep = meta_arr[c, ..., 2]
        ix = (gx + 1.0) * 0.5 * (W - 1)
        iy = (gy + 1.0) * 0.5 * (H - 1)
        ix0 = jnp.floor(ix)
        iy0 = jnp.floor(iy)
        sample = jnp.zeros((B, T, D), jnp.float32)
        for dy in (0, 1):
            for dx in (0, 1):
                xi = ix0 + dx
                yi = iy0 + dy
                wx = (ix - ix0) if dx else (1.0 - (ix - ix0))
                wy = (iy - iy0) if dy else (1.0 - (iy - iy0))
                valid = ((xi >= 0) & (xi <= W - 1) &
                         (yi >= 0) & (yi <= H - 1)).astype(jnp.float32)
                w = wx * wy * valid                               # (B, T)
                xi_c = jnp.clip(xi, 0, W - 1).astype(jnp.int32)
                yi_c = jnp.clip(yi, 0, H - 1).astype(jnp.int32)
                v = jax.vmap(lambda f, y, x: f[:, y, x])(features, yi_c, xi_c)
                sample = sample + jnp.transpose(v, (0, 2, 1)) * w[..., None]
        xs.append(sample * keep[..., None])
    xs = jnp.stack(xs, axis=-2)                                   # (B, T, C, D)
    out = (xs * attn[..., None]).sum(-2)
    return out @ woT + bo


if __name__ == "__main__":
    B, T, E, C, H, W = 2, 8, 32, 2, 16, 16
    pc_range = jnp.array([[-10.0, 10.0], [-10.0, 10.0], [-2.0, 2.0]], jnp.float32)

    key = jax.random.PRNGKey(0)
    ks = jax.random.split(key, 10)
    query = jax.random.normal(ks[0], (B, T, E), jnp.float32)
    anchor = jax.random.uniform(ks[1], (B, T, 3), jnp.float32)    # normalized anchors
    features_list = [
        jax.random.normal(ks[2], (B, E, H, W), jnp.float32),
        jax.random.normal(ks[3], (B, E, H, W), jnp.float32),
    ]
    # TODO(synk): original `capture` is an external camera callable; modeled
    # here as a deterministic linear projection pixels = anchor3d @ M + t.
    cameras = [
        (jax.random.normal(ks[4], (3, 2), jnp.float32) * 0.6,
         jnp.array([H / 2.0, W / 2.0], jnp.float32)),
        (jax.random.normal(ks[5], (3, 2), jnp.float32) * 0.05,
         jnp.array([H / 2.0, W / 2.0], jnp.float32)),
    ]

    # Parameters (shapes from MHCA.__init__): xavier_uniform weights,
    # zero output-proj bias, uniform attention bias.
    def xavier(k, shape):
        bound = float(np.sqrt(6.0 / (shape[0] + shape[1])))
        return jax.random.uniform(k, shape, jnp.float32, -bound, bound)

    wa = xavier(ks[6], (C, E))                                    # attention_weights.weight
    ba = jax.random.uniform(ks[7], (C,), jnp.float32,
                            -1.0 / np.sqrt(E), 1.0 / np.sqrt(E))  # attention_weights.bias
    wo = xavier(ks[8], (E, E))                                    # output_proj.weight
    bo = jnp.zeros((1, E), jnp.float32)                           # output_proj.bias

    # Kernel-side parameter layouts: per-camera rows so the camera grid axis
    # can select them through the BlockSpec (no dynamic lane slicing).
    wa_c1e = wa.reshape(C, 1, E)
    ba_c11 = ba.reshape(C, 1, 1)
    woT = wo.T
    woT_bf16 = woT.astype(jnp.bfloat16)

    meta_arr, feat_arr = prepare_camera_inputs(anchor, features_list, cameras, pc_range)

    out = mhca_pallas(query, feat_arr, meta_arr, wa_c1e, ba_c11, woT_bf16, bo, H=H, W=W)
    out = jax.block_until_ready(out)

    ref = mhca_reference(query, features_list, meta_arr, wa.T, ba.reshape(1, C), woT, bo)
    # Tolerance accounts for bf16 features in HBM + bf16 (f32-accumulated)
    # sampling and output-projection matmuls vs. the pure-f32 reference.
    np.testing.assert_allclose(np.asarray(out), np.asarray(ref), rtol=3e-2, atol=3e-2)
    print("KERNEL_OK")
</pallas_src>

<mosaic_0001>
module attributes {stable_mosaic.version = 11 : i64} {
  func.func @_mhca_kernel(%arg0: i32, %arg1: i32, %arg2: i32, %arg3: i32, %arg4: memref<1x8x32xf32, #tpu.memory_space<vmem>>, %arg5: memref<1x1x256x32xbf16, #tpu.memory_space<vmem>>, %arg6: memref<1x1x8x4xf32, #tpu.memory_space<vmem>>, %arg7: memref<1x1x32xf32, #tpu.memory_space<vmem>>, %arg8: memref<1x1x1xf32, #tpu.memory_space<vmem>>, %arg9: memref<32x32xbf16, #tpu.memory_space<vmem>>, %arg10: memref<1x32xf32, #tpu.memory_space<vmem>>, %arg11: memref<1x8x32xf32, #tpu.memory_space<vmem>>, %arg12: memref<8x32xf32, #tpu.memory_space<vmem>>) attributes {dimension_semantics = [#tpu.dimension_semantics<parallel>, #tpu.dimension_semantics<parallel>, #tpu.dimension_semantics<arbitrary>, #tpu.dimension_semantics<arbitrary>], iteration_bounds = array<i64: 2, 1, 2, 1>, scalar_prefetch = 0 : i64, scratch_operands = 1 : i64, tpu.core_type = #tpu.core_type<tc>, window_params = [{transform_indices = @transform_0, window_bounds = array<i64: 1, 8, 32>}, {transform_indices = @transform_1, window_bounds = array<i64: 1, 1, 256, 32>}, {transform_indices = @transform_2, window_bounds = array<i64: 1, 1, 8, 4>}, {transform_indices = @transform_3, window_bounds = array<i64: 1, 1, 32>}, {transform_indices = @transform_4, window_bounds = array<i64: 1, 1, 1>}, {pipeline_mode = #tpu.pipeline_mode<synchronous>, transform_indices = @transform_5, window_bounds = array<i64: 32, 32>}, {pipeline_mode = #tpu.pipeline_mode<synchronous>, transform_indices = @transform_6, window_bounds = array<i64: 1, 32>}, {transform_indices = @transform_7, window_bounds = array<i64: 1, 8, 32>}]} {
    %c0_i32 = arith.constant 0 : i32
    %0 = arith.cmpi eq, %arg2, %c0_i32 : i32
    %c0_i32_0 = arith.constant 0 : i32
    %1 = arith.cmpi eq, %arg3, %c0_i32_0 : i32
    %2 = arith.andi %0, %1 : i1
    %3 = arith.extui %2 : i1 to i32
    %c0_i32_1 = arith.constant 0 : i32
    %4 = arith.cmpi ne, %3, %c0_i32_1 : i32
    scf.if %4 {
      %cst_55 = arith.constant 0.000000e+00 : f32
      %192 = vector.broadcast %cst_55 : f32 to vector<8x32xf32>
      %c0_56 = arith.constant 0 : index
      %c0_57 = arith.constant 0 : index
      %193 = vector.load %arg12[%c0_56, %c0_57] : memref<8x32xf32, #tpu.memory_space<vmem>>, vector<8x32xf32>
      tpu.vector_store %arg12[%c0_56, %c0_57], %192 {strides = array<i32>} : memref<8x32xf32, #tpu.memory_space<vmem>>, vector<8x32xf32>,
    } else {
    }
    %c0 = arith.constant 0 : index
    %c0_2 = arith.constant 0 : index
    %c0_3 = arith.constant 0 : index
    %5 = vector.load %arg4[%c0, %c0_2, %c0_3] : memref<1x8x32xf32, #tpu.memory_space<vmem>>, vector<1x8x32xf32>
    %6 = vector.shape_cast %5 : vector<1x8x32xf32> to vector<8x32xf32>
    %c0_4 = arith.constant 0 : index
    %c0_5 = arith.constant 0 : index
    %c0_6 = arith.constant 0 : index
    %7 = vector.load %arg7[%c0_4, %c0_5, %c0_6] : memref<1x1x32xf32, #tpu.memory_space<vmem>>, vector<1x1x32xf32>
    %8 = vector.shape_cast %7 : vector<1x1x32xf32> to vector<1x32xf32>
    %c0_7 = arith.constant 0 : index
    %c0_8 = arith.constant 0 : index
    %c0_9 = arith.constant 0 : index
    %9 = vector.load %arg8[%c0_7, %c0_8, %c0_9] : memref<1x1x1xf32, #tpu.memory_space<vmem>>, vector<1x1x1xf32>
    %10 = vector.shape_cast %9 : vector<1x1x1xf32> to vector<1x1xf32>
    %11 = vector.broadcast %8 : vector<1x32xf32> to vector<8x32xf32>
    %12 = arith.mulf %6, %11 : vector<8x32xf32>
    %cst = arith.constant dense<0.000000e+00> : vector<8xf32>
    %13 = vector.multi_reduction <add>, %12, %cst [1] : vector<8x32xf32> to vector<8xf32>
    %14 = vector.shape_cast %13 : vector<8xf32> to vector<8x1xf32>
    %15 = vector.broadcast %10 : vector<1x1xf32> to vector<8x1xf32>
    %16 = arith.addf %14, %15 : vector<8x1xf32>
    %17 = arith.negf %16 : vector<8x1xf32>
    %18 = math.exp %17 : vector<8x1xf32>
    %cst_10 = arith.constant 1.000000e+00 : f32
    %19 = vector.broadcast %cst_10 : f32 to vector<8x1xf32>
    %20 = arith.addf %19, %18 : vector<8x1xf32>
    %21 = arith.divf %19, %20 : vector<8x1xf32>
    %c0_11 = arith.constant 0 : index
    %c0_12 = arith.constant 0 : index
    %c0_13 = arith.constant 0 : index
    %c0_14 = arith.constant 0 : index
    %22 = vector.load %arg6[%c0_11, %c0_12, %c0_13, %c0_14] : memref<1x1x8x4xf32, #tpu.memory_space<vmem>>, vector<1x1x8x4xf32>
    %23 = vector.shape_cast %22 : vector<1x1x8x4xf32> to vector<8x4xf32>
    %24 = vector.extract_strided_slice %23 {offsets = [0, 0], sizes = [8, 1], strides = [1, 1]} : vector<8x4xf32> to vector<8x1xf32>
    %25 = vector.extract_strided_slice %23 {offsets = [0, 1], sizes = [8, 1], strides = [1, 1]} : vector<8x4xf32> to vector<8x1xf32>
    %26 = vector.extract_strided_slice %23 {offsets = [0, 2], sizes = [8, 1], strides = [1, 1]} : vector<8x4xf32> to vector<8x1xf32>
    %cst_15 = arith.constant 1.000000e+00 : f32
    %27 = vector.broadcast %cst_15 : f32 to vector<8x1xf32>
    %28 = arith.addf %24, %27 : vector<8x1xf32>
    %cst_16 = arith.constant 7.500000e+00 : f32
    %29 = vector.broadcast %cst_16 : f32 to vector<8x1xf32>
    %30 = arith.mulf %28, %29 : vector<8x1xf32>
    %cst_17 = arith.constant 1.000000e+00 : f32
    %31 = vector.broadcast %cst_17 : f32 to vector<8x1xf32>
    %32 = arith.addf %25, %31 : vector<8x1xf32>
    %cst_18 = arith.constant 7.500000e+00 : f32
    %33 = vector.broadcast %cst_18 : f32 to vector<8x1xf32>
    %34 = arith.mulf %32, %33 : vector<8x1xf32>
    %35 = math.floor %30 : vector<8x1xf32>
    %36 = math.floor %34 : vector<8x1xf32>
    %37 = arith.subf %30, %35 : vector<8x1xf32>
    %38 = arith.subf %34, %36 : vector<8x1xf32>
    %39 = arith.fptosi %35 : vector<8x1xf32> to vector<8x1xi32>
    %40 = arith.fptosi %36 : vector<8x1xf32> to vector<8x1xi32>
    %c0_i32_19 = arith.constant 0 : i32
    %41 = vector.broadcast %c0_i32_19 : i32 to vector<8x1xi32>
    %42 = arith.cmpi sge, %39, %41 : vector<8x1xi32>
    %c15_i32 = arith.constant 15 : i32
    %43 = vector.broadcast %c15_i32 : i32 to vector<8x1xi32>
    %44 = arith.cmpi sle, %39, %43 : vector<8x1xi32>
    %45 = arith.andi %42, %44 : vector<8x1xi1>
    %46 = arith.extui %45 : vector<8x1xi1> to vector<8x1xi32>
    %47 = arith.sitofp %46 : vector<8x1xi32> to vector<8x1xf32>
    %c-1_i32 = arith.constant -1 : i32
    %48 = vector.broadcast %c-1_i32 : i32 to vector<8x1xi32>
    %49 = arith.cmpi sge, %39, %48 : vector<8x1xi32>
    %c14_i32 = arith.constant 14 : i32
    %50 = vector.broadcast %c14_i32 : i32 to vector<8x1xi32>
    %51 = arith.cmpi sle, %39, %50 : vector<8x1xi32>
    %52 = arith.andi %49, %51 : vector<8x1xi1>
    %53 = arith.extui %52 : vector<8x1xi1> to vector<8x1xi32>
    %54 = arith.sitofp %53 : vector<8x1xi32> to vector<8x1xf32>
    %c0_i32_20 = arith.constant 0 : i32
    %55 = vector.broadcast %c0_i32_20 : i32 to vector<8x1xi32>
    %56 = arith.cmpi sge, %40, %55 : vector<8x1xi32>
    %c15_i32_21 = arith.constant 15 : i32
    %57 = vector.broadcast %c15_i32_21 : i32 to vector<8x1xi32>
    %58 = arith.cmpi sle, %40, %57 : vector<8x1xi32>
    %59 = arith.andi %56, %58 : vector<8x1xi1>
    %60 = arith.extui %59 : vector<8x1xi1> to vector<8x1xi32>
    %61 = arith.sitofp %60 : vector<8x1xi32> to vector<8x1xf32>
    %c-1_i32_22 = arith.constant -1 : i32
    %62 = vector.broadcast %c-1_i32_22 : i32 to vector<8x1xi32>
    %63 = arith.cmpi sge, %40, %62 : vector<8x1xi32>
    %c14_i32_23 = arith.constant 14 : i32
    %64 = vector.broadcast %c14_i32_23 : i32 to vector<8x1xi32>
    %65 = arith.cmpi sle, %40, %64 : vector<8x1xi32>
    %66 = arith.andi %63, %65 : vector<8x1xi1>
    %67 = arith.extui %66 : vector<8x1xi1> to vector<8x1xi32>
    %68 = arith.sitofp %67 : vector<8x1xi32> to vector<8x1xf32>
    %69 = arith.mulf %26, %21 : vector<8x1xf32>
    %c16_i32 = arith.constant 16 : i32
    %70 = vector.broadcast %c16_i32 : i32 to vector<8x1xi32>
    %71 = arith.muli %40, %70 : vector<8x1xi32>
    %72 = arith.addi %71, %39 : vector<8x1xi32>
    %c256_i32 = arith.constant 256 : i32
    %73 = arith.muli %arg3, %c256_i32 : i32
    %cst_24 = arith.constant 1.000000e+00 : f32
    %74 = vector.broadcast %cst_24 : f32 to vector<8x1xf32>
    %75 = arith.subf %74, %37 : vector<8x1xf32>
    %cst_25 = arith.constant 1.000000e+00 : f32
    %76 = vector.broadcast %cst_25 : f32 to vector<8x1xf32>
    %77 = arith.subf %76, %38 : vector<8x1xf32>
    %78 = arith.mulf %75, %77 : vector<8x1xf32>
    %79 = arith.mulf %78, %47 : vector<8x1xf32>
    %80 = arith.mulf %79, %61 : vector<8x1xf32>
    %81 = arith.mulf %80, %69 : vector<8x1xf32>
    %c0_i32_26 = arith.constant 0 : i32
    %82 = vector.broadcast %c0_i32_26 : i32 to vector<8x1xi32>
    %83 = arith.addi %72, %82 : vector<8x1xi32>
    %84 = vector.broadcast %73 : i32 to vector<8x1xi32>
    %85 = arith.cmpi sge, %83, %84 : vector<8x1xi32>
    %c256_i32_27 = arith.constant 256 : i32
    %86 = arith.addi %73, %c256_i32_27 : i32
    %87 = vector.broadcast %86 : i32 to vector<8x1xi32>
    %88 = arith.cmpi slt, %83, %87 : vector<8x1xi32>
    %89 = arith.andi %85, %88 : vector<8x1xi1>
    %90 = arith.extui %89 : vector<8x1xi1> to vector<8x1xi32>
    %91 = arith.sitofp %90 : vector<8x1xi32> to vector<8x1xf32>
    %92 = arith.mulf %81, %91 : vector<8x1xf32>
    %cst_28 = arith.constant 1.000000e+00 : f32
    %93 = vector.broadcast %cst_28 : f32 to vector<8x1xf32>
    %94 = arith.subf %93, %38 : vector<8x1xf32>
    %95 = arith.mulf %37, %94 : vector<8x1xf32>
    %96 = arith.mulf %95, %54 : vector<8x1xf32>
    %97 = arith.mulf %96, %61 : vector<8x1xf32>
    %98 = arith.mulf %97, %69 : vector<8x1xf32>
    %c1_i32 = arith.constant 1 : i32
    %99 = vector.broadcast %c1_i32 : i32 to vector<8x1xi32>
    %100 = arith.addi %72, %99 : vector<8x1xi32>
    %101 = vector.broadcast %73 : i32 to vector<8x1xi32>
    %102 = arith.cmpi sge, %100, %101 : vector<8x1xi32>
    %c256_i32_29 = arith.constant 256 : i32
    %103 = arith.addi %73, %c256_i32_29 : i32
    %104 = vector.broadcast %103 : i32 to vector<8x1xi32>
    %105 = arith.cmpi slt, %100, %104 : vector<8x1xi32>
    %106 = arith.andi %102, %105 : vector<8x1xi1>
    %107 = arith.extui %106 : vector<8x1xi1> to vector<8x1xi32>
    %108 = arith.sitofp %107 : vector<8x1xi32> to vector<8x1xf32>
    %109 = arith.mulf %98, %108 : vector<8x1xf32>
    %cst_30 = arith.constant 1.000000e+00 : f32
    %110 = vector.broadcast %cst_30 : f32 to vector<8x1xf32>
    %111 = arith.subf %110, %37 : vector<8x1xf32>
    %112 = arith.mulf %111, %38 : vector<8x1xf32>
    %113 = arith.mulf %112, %47 : vector<8x1xf32>
    %114 = arith.mulf %113, %68 : vector<8x1xf32>
    %115 = arith.mulf %114, %69 : vector<8x1xf32>
    %c16_i32_31 = arith.constant 16 : i32
    %116 = vector.broadcast %c16_i32_31 : i32 to vector<8x1xi32>
    %117 = arith.addi %72, %116 : vector<8x1xi32>
    %118 = vector.broadcast %73 : i32 to vector<8x1xi32>
    %119 = arith.cmpi sge, %117, %118 : vector<8x1xi32>
    %c256_i32_32 = arith.constant 256 : i32
    %120 = arith.addi %73, %c256_i32_32 : i32
    %121 = vector.broadcast %120 : i32 to vector<8x1xi32>
    %122 = arith.cmpi slt, %117, %121 : vector<8x1xi32>
    %123 = arith.andi %119, %122 : vector<8x1xi1>
    %124 = arith.extui %123 : vector<8x1xi1> to vector<8x1xi32>
    %125 = arith.sitofp %124 : vector<8x1xi32> to vector<8x1xf32>
    %126 = arith.mulf %115, %125 : vector<8x1xf32>
    %127 = arith.mulf %37, %38 : vector<8x1xf32>
    %128 = arith.mulf %127, %54 : vector<8x1xf32>
    %129 = arith.mulf %128, %68 : vector<8x1xf32>
    %130 = arith.mulf %129, %69 : vector<8x1xf32>
    %c17_i32 = arith.constant 17 : i32
    %131 = vector.broadcast %c17_i32 : i32 to vector<8x1xi32>
    %132 = arith.addi %72, %131 : vector<8x1xi32>
    %133 = vector.broadcast %73 : i32 to vector<8x1xi32>
    %134 = arith.cmpi sge, %132, %133 : vector<8x1xi32>
    %c256_i32_33 = arith.constant 256 : i32
    %135 = arith.addi %73, %c256_i32_33 : i32
    %136 = vector.broadcast %135 : i32 to vector<8x1xi32>
    %137 = arith.cmpi slt, %132, %136 : vector<8x1xi32>
    %138 = arith.andi %134, %137 : vector<8x1xi1>
    %139 = arith.extui %138 : vector<8x1xi1> to vector<8x1xi32>
    %140 = arith.sitofp %139 : vector<8x1xi32> to vector<8x1xf32>
    %141 = arith.mulf %130, %140 : vector<8x1xf32>
    %142 = vector.broadcast %73 : i32 to vector<8x1xi32>
    %143 = arith.subi %72, %142 : vector<8x1xi32>
    %c256_i32_34 = arith.constant 256 : i32
    %c0_i32_35 = arith.constant 0 : i32
    %144 = arith.cmpi eq, %c256_i32_34, %c0_i32_35 : i32
    %c1_i32_36 = arith.constant 1 : i32
    %145 = arith.select %144, %c1_i32_36, %c256_i32_34 : i32
    %146 = vector.broadcast %145 : i32 to vector<8x1xi32>
    %147 = arith.remsi %143, %146 : vector<8x1xi32>
    %c0_i32_37 = arith.constant 0 : i32
    %148 = vector.broadcast %c0_i32_37 : i32 to vector<8x1xi32>
    %149 = arith.cmpi ne, %147, %148 : vector<8x1xi32>
    %c0_i32_38 = arith.constant 0 : i32
    %150 = vector.broadcast %c0_i32_38 : i32 to vector<8x1xi32>
    %151 = arith.cmpi slt, %147, %150 : vector<8x1xi32>
    %c0_i32_39 = arith.constant 0 : i32
    %152 = arith.cmpi slt, %145, %c0_i32_39 : i32
    %153 = vector.broadcast %152 : i1 to vector<8x1xi1>
    %154 = vector.broadcast %153 : vector<8x1xi1> to vector<8x1xi1>
    %155 = arith.xori %151, %154 : vector<8x1xi1>
    %156 = arith.andi %155, %149 : vector<8x1xi1>
    %157 = vector.broadcast %145 : i32 to vector<8x1xi32>
    %158 = arith.addi %147, %157 : vector<8x1xi32>
    %159 = arith.select %156, %158, %147 : vector<8x1xi1>, vector<8x1xi32>
    %160 = tpu.iota {dimensions = array<i32: 1>} : vector<1x256xi32>
    %161 = vector.broadcast %160 : vector<1x256xi32> to vector<8x256xi32>
    %162 = vector.broadcast %159 : vector<8x1xi32> to vector<8x256xi32>
    %163 = arith.cmpi eq, %161, %162 : vector<8x256xi32>
    %164 = arith.extui %163 : vector<8x256xi1> to vector<8x256xi32>
    %165 = arith.sitofp %164 : vector<8x256xi32> to vector<8x256xf32>
    %166 = vector.broadcast %92 : vector<8x1xf32> to vector<8x256xf32>
    %167 = arith.mulf %166, %165 : vector<8x256xf32>
    %c1_i32_40 = arith.constant 1 : i32
    %168 = tpu.dynamic_rotate %165 by %c1_i32_40 dim 1 : vector<8x256xf32>, i32 -> vector<8x256xf32>
    %169 = vector.broadcast %109 : vector<8x1xf32> to vector<8x256xf32>
    %170 = arith.mulf %169, %168 : vector<8x256xf32>
    %171 = arith.addf %167, %170 : vector<8x256xf32>
    %c16_i32_41 = arith.constant 16 : i32
    %172 = tpu.dynamic_rotate %165 by %c16_i32_41 dim 1 : vector<8x256xf32>, i32 -> vector<8x256xf32>
    %173 = vector.broadcast %126 : vector<8x1xf32> to vector<8x256xf32>
    %174 = arith.mulf %173, %172 : vector<8x256xf32>
    %175 = arith.addf %171, %174 : vector<8x256xf32>
    %c17_i32_42 = arith.constant 17 : i32
    %176 = tpu.dynamic_rotate %165 by %c17_i32_42 dim 1 : vector<8x256xf32>, i32 -> vector<8x256xf32>
    %177 = vector.broadcast %141 : vector<8x1xf32> to vector<8x256xf32>
    %178 = arith.mulf %177, %176 : vector<8x256xf32>
    %179 = arith.addf %175, %178 : vector<8x256xf32>
    %c0_43 = arith.constant 0 : index
    %c0_44 = arith.constant 0 : index
    %c0_45 = arith.constant 0 : index
    %c0_46 = arith.constant 0 : index
    %180 = vector.load %arg5[%c0_43, %c0_44, %c0_45, %c0_46] : memref<1x1x256x32xbf16, #tpu.memory_space<vmem>>, vector<1x1x256x32xbf16>
    %181 = vector.shape_cast %180 : vector<1x1x256x32xbf16> to vector<256x32xbf16>
    %c0_47 = arith.constant 0 : index
    %c0_48 = arith.constant 0 : index
    %182 = vector.load %arg12[%c0_47, %c0_48] : memref<8x32xf32, #tpu.memory_space<vmem>>, vector<8x32xf32>
    %183 = arith.truncf %179 : vector<8x256xf32> to vector<8x256xbf16>
    %cst_49 = arith.constant dense<0.000000e+00> : vector<8x32xf32>
    %184 = tpu.matmul %183, %181, %cst_49 {dimension_numbers = #tpu.dot_dimension_numbers<[1], [0], [0], [1], [0, 0, 1, 1], [], []>} : vector<8x256xbf16>, vector<256x32xbf16>, vector<8x32xf32> -> vector<8x32xf32>
    %185 = arith.addf %182, %184 : vector<8x32xf32>
    %c0_50 = arith.constant 0 : index
    %c0_51 = arith.constant 0 : index
    %186 = vector.load %arg12[%c0_50, %c0_51] : memref<8x32xf32, #tpu.memory_space<vmem>>, vector<8x32xf32>
    tpu.vector_store %arg12[%c0_50, %c0_51], %185 {strides = array<i32>} : memref<8x32xf32, #tpu.memory_space<vmem>>, vector<8x32xf32>,
    %c1_i32_52 = arith.constant 1 : i32
    %187 = arith.cmpi eq, %arg2, %c1_i32_52 : i32
    %c0_i32_53 = arith.constant 0 : i32
    %188 = arith.cmpi eq, %arg3, %c0_i32_53 : i32
    %189 = arith.andi %187, %188 : i1
    %190 = arith.extui %189 : i1 to i32
    %c0_i32_54 = arith.constant 0 : i32
    %191 = arith.cmpi ne, %190, %c0_i32_54 : i32
    scf.if %191 {
      %c0_55 = arith.constant 0 : index
      %c0_56 = arith.constant 0 : index
      %192 = vector.load %arg12[%c0_55, %c0_56] : memref<8x32xf32, #tpu.memory_space<vmem>>, vector<8x32xf32>
      %193 = arith.truncf %192 : vector<8x32xf32> to vector<8x32xbf16>
      %c0_57 = arith.constant 0 : index
      %c0_58 = arith.constant 0 : index
      %194 = vector.load %arg9[%c0_57, %c0_58] : memref<32x32xbf16, #tpu.memory_space<vmem>>, vector<32x32xbf16>
      %cst_59 = arith.constant dense<0.000000e+00> : vector<8x32xf32>
      %195 = tpu.matmul %193, %194, %cst_59 {dimension_numbers = #tpu.dot_dimension_numbers<[1], [0], [0], [1], [0, 0, 1, 1], [], []>} : vector<8x32xbf16>, vector<32x32xbf16>, vector<8x32xf32> -> vector<8x32xf32>
      %c0_60 = arith.constant 0 : index
      %c0_61 = arith.constant 0 : index
      %196 = vector.load %arg10[%c0_60, %c0_61] : memref<1x32xf32, #tpu.memory_space<vmem>>, vector<1x32xf32>
      %197 = vector.broadcast %196 : vector<1x32xf32> to vector<8x32xf32>
      %198 = arith.addf %195, %197 : vector<8x32xf32>
      %c0_62 = arith.constant 0 : index
      %c0_63 = arith.constant 0 : index
      %c0_64 = arith.constant 0 : index
      %199 = vector.load %arg11[%c0_62, %c0_63, %c0_64] : memref<1x8x32xf32, #tpu.memory_space<vmem>>, vector<1x8x32xf32>
      %200 = vector.shape_cast %199 : vector<1x8x32xf32> to vector<8x32xf32>
      %201 = vector.shape_cast %198 : vector<8x32xf32> to vector<1x8x32xf32>
      tpu.vector_store %arg11[%c0_62, %c0_63, %c0_64], %201 {strides = array<i32>} : memref<1x8x32xf32, #tpu.memory_space<vmem>>, vector<1x8x32xf32>,
    } else {
    }
    return
  }
  func.func @transform_0(%arg0: i32, %arg1: i32, %arg2: i32, %arg3: i32) -> (i32, i32, i32) {
    %c0_i32 = arith.constant 0 : i32
    %c0_i32_0 = arith.constant 0 : i32
    return %arg0, %arg1, %c0_i32 : i32, i32, i32
  }
  func.func @transform_1(%arg0: i32, %arg1: i32, %arg2: i32, %arg3: i32) -> (i32, i32, i32, i32) {
    %c0_i32 = arith.constant 0 : i32
    %c0_i32_0 = arith.constant 0 : i32
    return %arg2, %arg0, %arg3, %c0_i32 : i32, i32, i32, i32
  }
  func.func @transform_2(%arg0: i32, %arg1: i32, %arg2: i32, %arg3: i32) -> (i32, i32, i32, i32) {
    %c0_i32 = arith.constant 0 : i32
    %c0_i32_0 = arith.constant 0 : i32
    return %arg2, %arg0, %arg1, %c0_i32 : i32, i32, i32, i32
  }
  func.func @transform_3(%arg0: i32, %arg1: i32, %arg2: i32, %arg3: i32) -> (i32, i32, i32) {
    %c0_i32 = arith.constant 0 : i32
    %c0_i32_0 = arith.constant 0 : i32
    %c0_i32_1 = arith.constant 0 : i32
    return %arg2, %c0_i32, %c0_i32_0 : i32, i32, i32
  }
  func.func @transform_4(%arg0: i32, %arg1: i32, %arg2: i32, %arg3: i32) -> (i32, i32, i32) {
    %c0_i32 = arith.constant 0 : i32
    %c0_i32_0 = arith.constant 0 : i32
    %c0_i32_1 = arith.constant 0 : i32
    return %arg2, %c0_i32, %c0_i32_0 : i32, i32, i32
  }
  func.func @transform_5(%arg0: i32, %arg1: i32, %arg2: i32, %arg3: i32) -> (i32, i32) {
    %c0_i32 = arith.constant 0 : i32
    %c0_i32_0 = arith.constant 0 : i32
    %c0_i32_1 = arith.constant 0 : i32
    return %c0_i32, %c0_i32_0 : i32, i32
  }
  func.func @transform_6(%arg0: i32, %arg1: i32, %arg2: i32, %arg3: i32) -> (i32, i32) {
    %c0_i32 = arith.constant 0 : i32
    %c0_i32_0 = arith.constant 0 : i32
    %c0_i32_1 = arith.constant 0 : i32
    return %c0_i32, %c0_i32_0 : i32, i32
  }
  func.func @transform_7(%arg0: i32, %arg1: i32, %arg2: i32, %arg3: i32) -> (i32, i32, i32) {
    %c0_i32 = arith.constant 0 : i32
    %c0_i32_0 = arith.constant 0 : i32
    return %arg0, %arg1, %c0_i32 : i32, i32, i32
  }
}

</mosaic_0001>

<llo_original>
// kernel: tpu_custom_call.1
$region0: #{tpu_custom_call.1}
  #allocation0 [shape = 'u32[]', space=smem, size = 0x4, offset = 0x4, fixed_abs, tag = 'smem constant byte address 0x4 - core index']
  #allocation1 [shape = 'u32[144,128]{1,0:T(1,128)}', space=vmem, size = 0x12000, scoped, tag = 'internal scratch']
  #allocation2 [shape = 'f32[8,32]{1,0:T(8,128)}', space=vmem, size = 0x1000, scoped, tag = 'scratch operand']
  %s0 = inlined_call_operand.vmem [shape: f32[2,8,32], index: 0, kind: input, shape index: {}]
  %s1 = inlined_call_operand.vmem [shape: bf16[2,2,256,32], index: 1, kind: input, shape index: {}]
  %s2 = inlined_call_operand.vmem [shape: f32[2,2,8,4], index: 2, kind: input, shape index: {}]
  %s3 = inlined_call_operand.vmem [shape: f32[2,1,32], index: 3, kind: input, shape index: {}]
  %s4 = inlined_call_operand.vmem [shape: f32[2,1,1], index: 4, kind: input, shape index: {}]
  %s5 = inlined_call_operand.vmem [shape: bf16[32,32], index: 5, kind: input, shape index: {}]
  %s6 = inlined_call_operand.vmem [shape: f32[1,32], index: 6, kind: input, shape index: {}]
  %s7 = inlined_call_operand.hbm [shape: f32[2,8,32], index: 7, kind: output, shape index: {}]
  %s8 = sld [smem:[#allocation0]]
  $region69: #{tpu_custom_call.1} parent=0
    _
  %s10 = ssub.s32 1, %s8
  %s11 = scalar_select 0, %s10, %s8
  $region1: #{tpu_custom_call.1} parent=0
    #allocation3 [shape = 'u8[8192]{0}', space=vmem, size = 0x2000, scoped, tag = 'output window, operand 0']
    #allocation4 [shape = 's32[2]{0}', space=sflag, size = 0x8, scoped, tag = 'scoped memory for tpu_custom_call.1']
    %12 = vsyncpa [#allocation4], 0
    %s13 = scalar_lea.sflag [#allocation4], 1
    %14 = vsyncpa %s13, 0
    loop: start=0, step=1, limit=6
    $region2: #{tpu_custom_call.1} parent=1 // loop_pre_header
      _
    $region3: #{tpu_custom_call.1} parent=1 // loop_header
      %s16 = sphi 0, %s20
      %p17 = scmp.ge.s32.totalorder %s16, 6
      %s23 = sphi 0, %s49
      %s24 = sphi 0, %s45
      %s25 = sphi 0, %s41
      %s26 = sphi 0, %s37
      %s27 = sphi 0, %s23
      %s28 = sphi 0, %s24
      %s29 = sphi 0, %s25
      %s30 = sphi 0, %s26
      %s31 = sphi 0, %s27
      %s32 = sphi 0, %s28
      %s33 = sphi 0, %s29
      %s34 = sphi 0, %s30
      %s54 = sphi 0, %s56
      %s57 = sphi 0, %s54
      %s58 = sphi 0, %s57
      %s74 = sphi 0, %s58
      %s84 = sphi 0, %s86
      %s87 = sphi 0, %s84
      %s88 = sphi 0, %s87
      %s104 = sphi 0, %s88
      %s114 = sphi 0, %s116
      %s117 = sphi 0, %s114
      %s118 = sphi 0, %s117
      %s134 = sphi 0, %s118
      %s140 = sphi 0, %s142
      %s143 = sphi 0, %s140
      %s144 = sphi 0, %s143
      %s160 = sphi 0, %s144
      %s166 = sphi 0, %s168
      %s169 = sphi 0, %s166
      %s170 = sphi 0, %s169
      %s186 = sphi 0, %s170
      %s190 = sphi 0, %s190
      %s192 = sphi 0, %s190
      %s193 = sphi 0, %s192
      %s207 = sphi 0, %s193
      %s211 = sphi 0, %s211
      %s213 = sphi 0, %s211
      %s214 = sphi 0, %s213
      %s228 = sphi 0, %s214
      %s236 = sphi 0, %s238
      %s239 = sphi 0, %s236
      %s240 = sphi 0, %s239
      %s256 = sphi 0, %s240
    $region4: #{tpu_custom_call.1} parent=1 // loop_header_branch
      %19 = sbr.rel (%p17) target = $region8
    $region5: #{tpu_custom_call.1} parent=1 // loop_body
      %s21 = ssub.s32 %s16, 1
      %s22 = ssub.s32 %s16, 2
      %s35 = sadd.s32 1, %s26
      %p36 = scmp.ge.s32.totalorder %s35, 1
      %s37 = scalar_select %p36, 0, %s35
      %s38 = sadd.s32 1, %s25
      %s39 = scalar_select %p36, %s38, %s25
      %p40 = scmp.ge.s32.totalorder %s39, 2
      %s41 = scalar_select %p40, 0, %s39
      %s42 = sadd.s32 1, %s24
      %s43 = scalar_select %p40, %s42, %s24
      %p44 = scmp.ge.s32.totalorder %s43, 1
      %s45 = scalar_select %p44, 0, %s43
      %s46 = sadd.s32 1, %s23
      %s47 = scalar_select %p44, %s46, %s23
      %p48 = scmp.ge.s32.totalorder %s47, 2
      %s49 = scalar_select %p48, 0, %s47
      %s50 = ssub.s32 %s23, %s49
      %s51 = ssub.s32 %s24, %s45
      %s52 = sor.u32 %s50, %s51
      %p53 = scmp.eq.s32.totalorder %s52, 0
      %s55 = sadd.s32 %s54, 1
      %s56 = scalar_select %p53, %s54, %s55
      %p59 = pneg %p53
      %p60 = scmp.eq.s32.totalorder %s16, 3
      %p61 = por %p59, %p60
      %p62 = scmp.ne.s32.totalorder %s54, %s57
      %p63 = scmp.eq.s32.totalorder %s16, 0
      %p64 = por %p62, %p63
      %p65 = scmp.ne.s32.totalorder %s54, %s57
      %p66 = scmp.eq.s32.totalorder %s21, 3
      %p67 = por %p65, %p66
      %p68 = scmp.ne.s32.totalorder %s57, %s58
      %p69 = scmp.eq.s32.totalorder %s21, 0
      %p70 = por %p68, %p69
      %p71 = scmp.ne.s32.totalorder %s57, %s58
      %p72 = scmp.eq.s32.totalorder %s22, 3
      %p73 = por %p71, %p72
      %p75 = scmp.ne.s32.totalorder %s58, %s74
      %p76 = scmp.eq.s32.totalorder %s22, 0
      %p77 = por %p75, %p76
      %s78 = ssub.s32 %s25, %s41
      %s79 = ssub.s32 %s23, %s49
      %s80 = sor.u32 %s78, %s79
      %s81 = ssub.s32 %s26, %s37
      %s82 = sor.u32 %s80, %s81
      %p83 = scmp.eq.s32.totalorder %s82, 0
      %s85 = sadd.s32 %s84, 1
      %s86 = scalar_select %p83, %s84, %s85
      %p89 = pneg %p83
      %p90 = scmp.eq.s32.totalorder %s16, 3
      %p91 = por %p89, %p90
      %p92 = scmp.ne.s32.totalorder %s84, %s87
      %p93 = scmp.eq.s32.totalorder %s16, 0
      %p94 = por %p92, %p93
      %p95 = scmp.ne.s32.totalorder %s84, %s87
      %p96 = scmp.eq.s32.totalorder %s21, 3
      %p97 = por %p95, %p96
      %p98 = scmp.ne.s32.totalorder %s87, %s88
      %p99 = scmp.eq.s32.totalorder %s21, 0
      %p100 = por %p98, %p99
      %p101 = scmp.ne.s32.totalorder %s87, %s88
      %p102 = scmp.eq.s32.totalorder %s22, 3
      %p103 = por %p101, %p102
      %p105 = scmp.ne.s32.totalorder %s88, %s104
      %p106 = scmp.eq.s32.totalorder %s22, 0
      %p107 = por %p105, %p106
      %s108 = ssub.s32 %s25, %s41
      %s109 = ssub.s32 %s23, %s49
      %s110 = sor.u32 %s108, %s109
      %s111 = ssub.s32 %s24, %s45
      %s112 = sor.u32 %s110, %s111
      %p113 = scmp.eq.s32.totalorder %s112, 0
      %s115 = sadd.s32 %s114, 1
      %s116 = scalar_select %p113, %s114, %s115
      %p119 = pneg %p113
      %p120 = scmp.eq.s32.totalorder %s16, 3
      %p121 = por %p119, %p120
      %p122 = scmp.ne.s32.totalorder %s114, %s117
      %p123 = scmp.eq.s32.totalorder %s16, 0
      %p124 = por %p122, %p123
      %p125 = scmp.ne.s32.totalorder %s114, %s117
      %p126 = scmp.eq.s32.totalorder %s21, 3
      %p127 = por %p125, %p126
      %p128 = scmp.ne.s32.totalorder %s117, %s118
      %p129 = scmp.eq.s32.totalorder %s21, 0
      %p130 = por %p128, %p129
      %p131 = scmp.ne.s32.totalorder %s117, %s118
      %p132 = scmp.eq.s32.totalorder %s22, 3
      %p133 = por %p131, %p132
      %p135 = scmp.ne.s32.totalorder %s118, %s134
      %p136 = scmp.eq.s32.totalorder %s22, 0
      %p137 = por %p135, %p136
      %s138 = ssub.s32 %s25, %s41
      %p139 = scmp.eq.s32.totalorder %s138, 0
      %s141 = sadd.s32 %s140, 1
      %s142 = scalar_select %p139, %s140, %s141
      %p145 = pneg %p139
      %p146 = scmp.eq.s32.totalorder %s16, 3
      %p147 = por %p145, %p146
      %p148 = scmp.ne.s32.totalorder %s140, %s143
      %p149 = scmp.eq.s32.totalorder %s16, 0
      %p150 = por %p148, %p149
      %p151 = scmp.ne.s32.totalorder %s140, %s143
      %p152 = scmp.eq.s32.totalorder %s21, 3
      %p153 = por %p151, %p152
      %p154 = scmp.ne.s32.totalorder %s143, %s144
      %p155 = scmp.eq.s32.totalorder %s21, 0
      %p156 = por %p154, %p155
      %p157 = scmp.ne.s32.totalorder %s143, %s144
      %p158 = scmp.eq.s32.totalorder %s22, 3
      %p159 = por %p157, %p158
      %p161 = scmp.ne.s32.totalorder %s144, %s160
      %p162 = scmp.eq.s32.totalorder %s22, 0
      %p163 = por %p161, %p162
      %s164 = ssub.s32 %s25, %s41
      %p165 = scmp.eq.s32.totalorder %s164, 0
      %s167 = sadd.s32 %s166, 1
      %s168 = scalar_select %p165, %s166, %s167
      %p171 = pneg %p165
      %p172 = scmp.eq.s32.totalorder %s16, 3
      %p173 = por %p171, %p172
      %p174 = scmp.ne.s32.totalorder %s166, %s169
      %p175 = scmp.eq.s32.totalorder %s16, 0
      %p176 = por %p174, %p175
      %p177 = scmp.ne.s32.totalorder %s166, %s169
      %p178 = scmp.eq.s32.totalorder %s21, 3
      %p179 = por %p177, %p178
      %p180 = scmp.ne.s32.totalorder %s169, %s170
      %p181 = scmp.eq.s32.totalorder %s21, 0
      %p182 = por %p180, %p181
      %p183 = scmp.ne.s32.totalorder %s169, %s170
      %p184 = scmp.eq.s32.totalorder %s22, 3
      %p185 = por %p183, %p184
      %p187 = scmp.ne.s32.totalorder %s170, %s186
      %p188 = scmp.eq.s32.totalorder %s22, 0
      %p189 = por %p187, %p188
      %s191 = sadd.s32 %s190, 1
      %p194 = scmp.eq.s32.totalorder %s16, 3
      %p195 = scmp.ne.s32.totalorder %s190, %s192
      %p196 = scmp.eq.s32.totalorder %s16, 0
      %p197 = por %p195, %p196
      %p198 = scmp.ne.s32.totalorder %s190, %s192
      %p199 = scmp.eq.s32.totalorder %s21, 3
      %p200 = por %p198, %p199
      %p201 = scmp.ne.s32.totalorder %s192, %s193
      %p202 = scmp.eq.s32.totalorder %s21, 0
      %p203 = por %p201, %p202
      %p204 = scmp.ne.s32.totalorder %s192, %s193
      %p205 = scmp.eq.s32.totalorder %s22, 3
      %p206 = por %p204, %p205
      %p208 = scmp.ne.s32.totalorder %s193, %s207
      %p209 = scmp.eq.s32.totalorder %s22, 0
      %p210 = por %p208, %p209
      %s212 = sadd.s32 %s211, 1
      %p215 = scmp.eq.s32.totalorder %s16, 3
      %p216 = scmp.ne.s32.totalorder %s211, %s213
      %p217 = scmp.eq.s32.totalorder %s16, 0
      %p218 = por %p216, %p217
      %p219 = scmp.ne.s32.totalorder %s211, %s213
      %p220 = scmp.eq.s32.totalorder %s21, 3
      %p221 = por %p219, %p220
      %p222 = scmp.ne.s32.totalorder %s213, %s214
      %p223 = scmp.eq.s32.totalorder %s21, 0
      %p224 = por %p222, %p223
      %p225 = scmp.ne.s32.totalorder %s213, %s214
      %p226 = scmp.eq.s32.totalorder %s22, 3
      %p227 = por %p225, %p226
      %p229 = scmp.ne.s32.totalorder %s214, %s228
      %p230 = scmp.eq.s32.totalorder %s22, 0
      %p231 = por %p229, %p230
      %s232 = ssub.s32 %s23, %s49
      %s233 = ssub.s32 %s24, %s45
      %s234 = sor.u32 %s232, %s233
      %p235 = scmp.eq.s32.totalorder %s234, 0
      %s237 = sadd.s32 %s236, 1
      %s238 = scalar_select %p235, %s236, %s237
      %p241 = pneg %p235
      %p242 = scmp.eq.s32.totalorder %s16, 3
      %p243 = por %p241, %p242
      %p244 = scmp.ne.s32.totalorder %s236, %s239
      %p245 = scmp.eq.s32.totalorder %s16, 0
      %p246 = por %p244, %p245
      %p247 = scmp.ne.s32.totalorder %s236, %s239
      %p248 = scmp.eq.s32.totalorder %s21, 3
      %p249 = por %p247, %p248
      %p250 = scmp.ne.s32.totalorder %s239, %s240
      %p251 = scmp.eq.s32.totalorder %s21, 0
      %p252 = por %p250, %p251
      %p253 = scmp.ne.s32.totalorder %s239, %s240
      %p254 = scmp.eq.s32.totalorder %s22, 3
      %p255 = por %p253, %p254
      %p257 = scmp.ne.s32.totalorder %s240, %s256
      %p258 = scmp.eq.s32.totalorder %s22, 0
      %p259 = por %p257, %p258
      %p260 = scmp.le.s32.totalorder 1, %s16
      %p261 = scmp.lt.s32.totalorder %s16, 5
      %p262 = pnand %p260, %p261
      %p263 = pneg %p262
      // Predicated region
      $region9: #{tpu_custom_call.1} parent=5 // pred_check
        _
      $region10: #{tpu_custom_call.1} parent=5 // pred_check_branch
        %265 = sbr.rel (%p262) target = $region12
      $region11: #{tpu_custom_call.1} parent=5 // pred_region
        %s266 = ssub.s32 %s16, 1
        // Predicated region
        $region13: #{tpu_custom_call.1} parent=11 // pred_check
          %p267 = pneg %p203
        $region14: #{tpu_custom_call.1} parent=11 // pred_check_branch
          %269 = sbr.rel (%p267) target = $region16
        $region15: #{tpu_custom_call.1} parent=11 // pred_region
          _
        $region16: #{tpu_custom_call.1} parent=11 // pred_fallthru
          _
        // Predicated region
        $region17: #{tpu_custom_call.1} parent=11 // pred_check
          %p270 = pneg %p224
        $region18: #{tpu_custom_call.1} parent=11 // pred_check_branch
          %272 = sbr.rel (%p270) target = $region20
        $region19: #{tpu_custom_call.1} parent=11 // pred_region
          _
        $region20: #{tpu_custom_call.1} parent=11 // pred_fallthru
          _
      $region12: #{tpu_custom_call.1} parent=5 // pred_fallthru
        _
      %p273 = scmp.lt.s32.totalorder %s16, 4
      // Predicated region
      $region21: #{tpu_custom_call.1} parent=5 // pred_check
        %p274 = pneg %p273
      $region22: #{tpu_custom_call.1} parent=5 // pred_check_branch
        %276 = sbr.rel (%p274) target = $region24
      $region23: #{tpu_custom_call.1} parent=5 // pred_region
        // Predicated region
        $region25: #{tpu_custom_call.1} parent=23 // pred_check
          %p277 = pneg %p64
        $region26: #{tpu_custom_call.1} parent=23 // pred_check_branch
          %279 = sbr.rel (%p277) target = $region28
        $region27: #{tpu_custom_call.1} parent=23 // pred_region
          %p280 = scmp.lt.s32.totalorder %s23, 1
          %s281 = scalar_select %p280, %s23, 1
          %p282 = scmp.lt.s32.totalorder %s24, 0
          %s283 = scalar_select %p282, %s24, 0
          %s284 = sadd.s32 %s283, %s281
          %s285 = smul.addr %s284, 8
          %s286 = scalar_lea.vmem %s0, %s285
        $region28: #{tpu_custom_call.1} parent=23 // pred_fallthru
          _
        // Predicated region
        $region29: #{tpu_custom_call.1} parent=23 // pred_check
          %p287 = pneg %p94
        $region30: #{tpu_custom_call.1} parent=23 // pred_check_branch
          %289 = sbr.rel (%p287) target = $region32
        $region31: #{tpu_custom_call.1} parent=23 // pred_region
          %s290 = smul.u32 32, %s26
          %p291 = scmp.lt.s32.totalorder %s25, 1
          %s292 = scalar_select %p291, %s25, 1
          %p293 = scmp.lt.s32.totalorder %s23, 1
          %s294 = scalar_select %p293, %s23, 1
          %p295 = scmp.lt.s32.totalorder %s290, 31
          %s296 = scalar_select %p295, %s290, 31
          %s297 = smul.addr %s294, 32
          %s298 = sadd.s32 %s296, %s297
          %s299 = smul.addr %s292, 64
          %s300 = sadd.s32 %s298, %s299
          %s301 = smul.addr %s300, 4
          %s302 = scalar_lea.vmem %s1, %s301
          %s303 = smul.u32 32, %s26
        $region32: #{tpu_custom_call.1} parent=23 // pred_fallthru
          _
        // Predicated region
        $region33: #{tpu_custom_call.1} parent=23 // pred_check
          %p304 = pneg %p124
        $region34: #{tpu_custom_call.1} parent=23 // pred_check_branch
          %306 = sbr.rel (%p304) target = $region36
        $region35: #{tpu_custom_call.1} parent=23 // pred_region
          %p307 = scmp.lt.s32.totalorder %s25, 1
          %s308 = scalar_select %p307, %s25, 1
          %p309 = scmp.lt.s32.totalorder %s23, 1
          %s310 = scalar_select %p309, %s23, 1
          %p311 = scmp.lt.s32.totalorder %s24, 0
          %s312 = scalar_select %p311, %s24, 0
          %s313 = sadd.s32 %s312, %s310
          %s314 = smul.addr %s308, 2
          %s315 = sadd.s32 %s313, %s314
          %s316 = smul.addr %s315, 8
          %s317 = scalar_lea.vmem %s2, %s316
        $region36: #{tpu_custom_call.1} parent=23 // pred_fallthru
          _
        // Predicated region
        $region37: #{tpu_custom_call.1} parent=23 // pred_check
          %p318 = pneg %p150
        $region38: #{tpu_custom_call.1} parent=23 // pred_check_branch
          %320 = sbr.rel (%p318) target = $region40
        $region39: #{tpu_custom_call.1} parent=23 // pred_region
          %p321 = scmp.lt.s32.totalorder %s25, 1
          %s322 = scalar_select %p321, %s25, 1
          %s323 = scalar_lea.vmem %s3, %s322
        $region40: #{tpu_custom_call.1} parent=23 // pred_fallthru
          _
        // Predicated region
        $region41: #{tpu_custom_call.1} parent=23 // pred_check
          %p324 = pneg %p176
        $region42: #{tpu_custom_call.1} parent=23 // pred_check_branch
          %326 = sbr.rel (%p324) target = $region44
        $region43: #{tpu_custom_call.1} parent=23 // pred_region
          %p327 = scmp.lt.s32.totalorder %s25, 1
          %s328 = scalar_select %p327, %s25, 1
          %s329 = scalar_lea.vmem %s4, %s328
        $region44: #{tpu_custom_call.1} parent=23 // pred_fallthru
          _
      $region24: #{tpu_custom_call.1} parent=5 // pred_fallthru
        _
      %p330 = scmp.le.s32.totalorder 1, %s16
      %p331 = scmp.lt.s32.totalorder %s16, 5
      %p332 = pnand %p330, %p331
      %p333 = pneg %p332
      // Predicated region
      $region45: #{tpu_custom_call.1} parent=5 // pred_check
        _
      $region46: #{tpu_custom_call.1} parent=5 // pred_check_branch
        %335 = sbr.rel (%p332) target = $region48
      $region47: #{tpu_custom_call.1} parent=5 // pred_region
        %s336 = ssub.s32 %s16, 1
        %p337 = scmp.lt.s32.totalorder %s27, 1
        %s338 = scalar_select %p337, %s27, 1
        %p339 = scmp.lt.s32.totalorder %s28, 0
        %s340 = scalar_select %p339, %s28, 0
        %s341 = sadd.s32 %s340, %s338
        %s342 = smul.addr %s341, 8
        %s343 = scalar_lea.vmem %s0, %s342
        %p344 = pneg %p70
        %p345 = pneg %p67
        %s346 = smul.u32 32, %s30
        %p347 = scmp.lt.s32.totalorder %s29, 1
        %s348 = scalar_select %p347, %s29, 1
        %p349 = scmp.lt.s32.totalorder %s27, 1
        %s350 = scalar_select %p349, %s27, 1
        %p351 = scmp.lt.s32.totalorder %s346, 31
        %s352 = scalar_select %p351, %s346, 31
        %s353 = smul.addr %s350, 32
        %s354 = sadd.s32 %s352, %s353
        %s355 = smul.addr %s348, 64
        %s356 = sadd.s32 %s354, %s355
        %s357 = smul.addr %s356, 4
        %s358 = scalar_lea.vmem %s1, %s357
        %p359 = pneg %p100
        %p360 = pneg %p97
        %p361 = scmp.lt.s32.totalorder %s29, 1
        %s362 = scalar_select %p361, %s29, 1
        %p363 = scmp.lt.s32.totalorder %s27, 1
        %s364 = scalar_select %p363, %s27, 1
        %p365 = scmp.lt.s32.totalorder %s28, 0
        %s366 = scalar_select %p365, %s28, 0
        %s367 = sadd.s32 %s366, %s364
        %s368 = smul.addr %s362, 2
        %s369 = sadd.s32 %s367, %s368
        %s370 = smul.addr %s369, 8
        %s371 = scalar_lea.vmem %s2, %s370
        %p372 = pneg %p130
        %p373 = pneg %p127
        %p374 = scmp.lt.s32.totalorder %s29, 1
        %s375 = scalar_select %p374, %s29, 1
        %s376 = scalar_lea.vmem %s3, %s375
        %p377 = pneg %p156
        %p378 = pneg %p153
        %p379 = scmp.lt.s32.totalorder %s29, 1
        %s380 = scalar_select %p379, %s29, 1
        %s381 = scalar_lea.vmem %s4, %s380
        %p382 = pneg %p182
        %p383 = pneg %p179
        %p384 = pneg %p203
        %p385 = pneg %p200
        %p386 = pneg %p224
        %p387 = pneg %p221
        %p388 = pneg %p252
        %p389 = pneg %p249
        %s390 = sand.u32 %s239, 1
        %s391 = scalar_lea.sflag [#allocation4], %s390
        %s392 = sand.u32 %s239, 1
        %s393 = smul.addr %s392, 8
        %s394 = scalar_lea.vmem [#allocation3], %s393
        %p395 = scmp.lt.s32.totalorder %s27, 1
        %s396 = scalar_select %p395, %s27, 1
        %p397 = scmp.lt.s32.totalorder %s28, 0
        %s398 = scalar_select %p397, %s28, 0
        %s399 = sadd.s32 %s398, %s396
        %s400 = smul.addr %s399, 8
        %s401 = scalar_lea.vmem %s0, %s400
        %s402 = smul.u32 32, %s30
        %p403 = scmp.lt.s32.totalorder %s29, 1
        %s404 = scalar_select %p403, %s29, 1
        %p405 = scmp.lt.s32.totalorder %s27, 1
        %s406 = scalar_select %p405, %s27, 1
        %p407 = scmp.lt.s32.totalorder %s402, 31
        %s408 = scalar_select %p407, %s402, 31
        %s409 = smul.addr %s406, 32
        %s410 = sadd.s32 %s408, %s409
        %s411 = smul.addr %s404, 64
        %s412 = sadd.s32 %s410, %s411
        %s413 = smul.addr %s412, 4
        %s414 = scalar_lea.vmem %s1, %s413
        %s415 = smul.u32 32, %s30
        %p416 = scmp.lt.s32.totalorder %s29, 1
        %s417 = scalar_select %p416, %s29, 1
        %p418 = scmp.lt.s32.totalorder %s27, 1
        %s419 = scalar_select %p418, %s27, 1
        %p420 = scmp.lt.s32.totalorder %s28, 0
        %s421 = scalar_select %p420, %s28, 0
        %s422 = sadd.s32 %s421, %s419
        %s423 = smul.addr %s417, 2
        %s424 = sadd.s32 %s422, %s423
        %s425 = smul.addr %s424, 8
        %s426 = scalar_lea.vmem %s2, %s425
        %p427 = scmp.lt.s32.totalorder %s29, 1
        %s428 = scalar_select %p427, %s29, 1
        %s429 = scalar_lea.vmem %s3, %s428
        %p430 = scmp.lt.s32.totalorder %s29, 1
        %s431 = scalar_select %p430, %s29, 1
        %s432 = scalar_lea.vmem %s4, %s431
        %p434 = scmp.eq.s32.totalorder %s29, 0
        %p435 = scmp.eq.s32.totalorder %s30, 0
        %p436 = pnand %p434, %p435
        %p437 = pneg %p436
        // Predicated region
        $region49: #{tpu_custom_call.1} parent=47 // pred_check
          _
        $region50: #{tpu_custom_call.1} parent=47 // pred_check_branch
          %439 = sbr.rel (%p436) target = $region52
        $region51: #{tpu_custom_call.1} parent=47 // pred_region
          %vm440 = vcmask 261120
          %441 = vst.msk [vmem:[#allocation2] sm:$0xff] %vm440, 0.0
        $region52: #{tpu_custom_call.1} parent=47 // pred_fallthru
          _
        %v442 = vld [vmem:[%s401] sm:$0xff]
        %v443 = vld [vmem:[%s429] sm:$0x1]
        %v444 = vld [vmem:[%s432] sm:$0x1]
        %v446 = vlaneseq
        %v447 = vshrl.u32 %v446, 7
        %v448 = vsub.s32 0, %v447
        %v449 = vrot.slane %v443, %v448
        %v451 = vmul.f32 %v442, %v449
        %vm452 = vcmask 261120
        %v453 = vsel %vm452, %v451, 0.0
        %454 = vadd.xlane.f32.xlu0 %v453
        %v455 = vpop.xlane.xlu0 %454
        %v457 = vlaneseq
        %v458 = vshrl.u32 %v457, 7
        %v459 = vsub.s32 0, %v458
        %v460 = vrot.slane %v444, %v459
        %v462 = vadd.f32 %v455, %v460
        %v463 = vxor.u32 %v462, 2147483648
        %v464 = vmul.f32 %v463, 1.442695
        %v465 = vpow.pop %v464
        %v466 = vadd.f32 %v465, 1.0
        %v467 = vrcp.pop %v466
        %v468 = vmul.f32 1.0, %v467
        %v469 = vld [vmem:[%s426] sm:$0xff]
        %v470 = vadd.f32 %v469, 1.0
        %v471 = vmul.f32 %v470, 7.5
        %v472 = vfloor.f32 %v471
        %v473 = vsub.f32 %v471, %v472
        %v474 = vcvt.f32.s32.to.zero.pseudo %v472
        %vm475 = vcmp.ge.s32.totalorder %v474, 0
        %vm476 = vcmp.le.s32.totalorder %v474, 15
        %vm477 = vmand %vm475, %vm476
        %v478 = vsel %vm477, 1, 0
        %v479 = vcvt.s32.f32 %v478
        %vm480 = vcmp.ge.s32.totalorder %v474, 4294967295
        %vm481 = vcmp.le.s32.totalorder %v474, 14
        %vm482 = vmand %vm480, %vm481
        %v483 = vsel %vm482, 1, 0
        %v484 = vcvt.s32.f32 %v483
        %486 = vrot.lane.b32.xlu0 %v468, 2
        %v487 = vpop.permute.xlu0 %486
        %v489 = vmul.f32 %v469, %v487
        %v490 = vmul.u32 %v474, 16
        %491 = vrot.lane.b32.xlu0 %v474, 1
        %v492 = vpop.permute.xlu0 %491
        %v493 = vadd.s32 %v490, %v492
        %s494 = smul.u32 %s30, 256
        %v495 = vsub.f32 1.0, %v473
        %497 = vrot.lane.b32.xlu0 %v495, 127
        %v498 = vpop.permute.xlu0 %497
        %v500 = vmul.f32 %v495, %v498
        %v501 = vmul.f32 %v500, %v479
        %503 = vrot.lane.b32.xlu0 %v479, 127
        %v504 = vpop.permute.xlu0 %503
        %v506 = vmul.f32 %v501, %v504
        %508 = vrot.lane.b32.xlu0 %v489, 126
        %v509 = vpop.permute.xlu0 %508
        %v511 = vmul.f32 %v506, %v509
        %v512 = vstv %s494
        %vm513 = vcmp.ge.s32.totalorder %v493, %v512
        %s514 = sadd.s32 %s494, 256
        %v515 = vstv %s514
        %vm516 = vcmp.lt.s32.totalorder %v493, %v515
        %vm517 = vmand %vm513, %vm516
        %v518 = vsel %vm517, 1, 0
        %v519 = vcvt.s32.f32 %v518
        %521 = vrot.lane.b32.xlu0 %v519, 127
        %v522 = vpop.permute.xlu0 %521
        %v524 = vmul.f32 %v511, %v522
        %v525 = vmul.f32 %v473, %v498
        %v526 = vmul.f32 %v525, %v484
        %v527 = vmul.f32 %v526, %v504
        %v528 = vmul.f32 %v527, %v509
        %v529 = vadd.s32 %v493, 1
        %vm530 = vcmp.ge.s32.totalorder %v529, %v512
        %vm531 = vcmp.lt.s32.totalorder %v529, %v515
        %vm532 = vmand %vm530, %vm531
        %v533 = vsel %vm532, 1, 0
        %v534 = vcvt.s32.f32 %v533
        %536 = vrot.lane.b32.xlu0 %v534, 127
        %v537 = vpop.permute.xlu0 %536
        %v539 = vmul.f32 %v528, %v537
        %541 = vrot.lane.b32.xlu0 %v473, 127
        %v542 = vpop.permute.xlu0 %541
        %v544 = vmul.f32 %v495, %v542
        %v545 = vmul.f32 %v544, %v479
        %547 = vrot.lane.b32.xlu0 %v484, 127
        %v548 = vpop.permute.xlu0 %547
        %v550 = vmul.f32 %v545, %v548
        %v551 = vmul.f32 %v550, %v509
        %v552 = vadd.s32 %v493, 16
        %vm553 = vcmp.ge.s32.totalorder %v552, %v512
        %vm554 = vcmp.lt.s32.totalorder %v552, %v515
        %vm555 = vmand %vm553, %vm554
        %v556 = vsel %vm555, 1, 0
        %v557 = vcvt.s32.f32 %v556
        %559 = vrot.lane.b32.xlu0 %v557, 127
        %v560 = vpop.permute.xlu0 %559
        %v562 = vmul.f32 %v551, %v560
        %v563 = vmul.f32 %v473, %v542
        %v564 = vmul.f32 %v563, %v484
        %v565 = vmul.f32 %v564, %v548
        %v566 = vmul.f32 %v565, %v509
        %v567 = vadd.s32 %v493, 17
        %vm568 = vcmp.ge.s32.totalorder %v567, %v512
        %vm569 = vcmp.lt.s32.totalorder %v567, %v515
        %vm570 = vmand %vm568, %vm569
        %v571 = vsel %vm570, 1, 0
        %v572 = vcvt.s32.f32 %v571
        %574 = vrot.lane.b32.xlu0 %v572, 127
        %v575 = vpop.permute.xlu0 %574
        %v577 = vmul.f32 %v566, %v575
        %v578 = vsub.s32 %v493, %v512
        %vm579 = vcmp.lt.s32.totalorder %v578, 0
        %v580 = vsub.s32 0, %v578
        %v581 = vsel %vm579, %v580, %v578
        %v582 = vshrl.u32 %v581, 8
        %v583 = vand.u32 %v581, 255
        %v584 = vsub.s32 0, %v583
        %v585 = vsel %vm579, %v584, %v583
        %vm586 = vcmp.ne.s32.totalorder %v585, 0
        %vm587 = vcmp.lt.s32.totalorder %v585, 0
        %vm588 = vmand %vm587, %vm586
        %v589 = vadd.s32 %v585, 256
        %v590 = vsel %vm588, %v589, %v585
        %v591 = vlaneseq
        %v592 = vand.u32 %v591, 127
        %v593 = vadd.s32 %v592, 128
        %594 = vset.pattern.permute.xlu0 1
        %595 = vperm.xlu0 %594, %v590
        %v596 = vpop.permute.xlu0 %595
        %vm597 = vcmp.eq.s32.totalorder %v592, %v596
        %vm598 = vcmp.eq.s32.totalorder %v593, %v596
        %v599 = vsel %vm597, 1, 0
        %v600 = vsel %vm598, 1, 0
        %v601 = vcvt.s32.f32 %v599
        %v602 = vcvt.s32.f32 %v600
        %604 = vset.pattern.permute.xlu0 0
        %605 = vperm.xlu0 %604, %v524
        %v606 = vpop.permute.xlu0 %605
        %v608 = vmul.f32 %v606, %v601
        %v609 = vmul.f32 %v606, %v602
        %610 = vrot.lane.b32.xlu0 %v601, 1
        %v611 = vpop.permute.xlu0 %610
        %612 = vrot.lane.b32.xlu0 %v602, 1
        %v613 = vpop.permute.xlu0 %612
        %vm614 = vcmp.lt.s32.totalorder %v592, 1
        %v615 = vsel %vm614, %v611, %v613
        %v616 = vsel %vm614, %v613, %v611
        %618 = vset.pattern.permute.xlu0 0
        %619 = vperm.xlu0 %618, %v539
        %v620 = vpop.permute.xlu0 %619
        %v622 = vmul.f32 %v620, %v616
        %v623 = vmul.f32 %v620, %v615
        %v624 = vadd.f32 %v608, %v622
        %v625 = vadd.f32 %v609, %v623
        %626 = vrot.lane.b32.xlu0 %v601, 16
        %v627 = vpop.permute.xlu0 %626
        %628 = vrot.lane.b32.xlu0 %v602, 16
        %v629 = vpop.permute.xlu0 %628
        %vm630 = vcmp.lt.s32.totalorder %v592, 16
        %v631 = vsel %vm630, %v627, %v629
        %v632 = vsel %vm630, %v629, %v627
        %634 = vset.pattern.permute.xlu0 0
        %635 = vperm.xlu0 %634, %v562
        %v636 = vpop.permute.xlu0 %635
        %v638 = vmul.f32 %v636, %v632
        %v639 = vmul.f32 %v636, %v631
        %v640 = vadd.f32 %v624, %v638
        %v641 = vadd.f32 %v625, %v639
        %642 = vrot.lane.b32.xlu0 %v601, 17
        %v643 = vpop.permute.xlu0 %642
        %644 = vrot.lane.b32.xlu0 %v602, 17
        %v645 = vpop.permute.xlu0 %644
        %vm646 = vcmp.lt.s32.totalorder %v592, 17
        %v647 = vsel %vm646, %v643, %v645
        %v648 = vsel %vm646, %v645, %v643
        %650 = vset.pattern.permute.xlu0 0
        %651 = vperm.xlu0 %650, %v577
        %v652 = vpop.permute.xlu0 %651
        %v654 = vmul.f32 %v652, %v648
        %v655 = vmul.f32 %v652, %v647
        %v656 = vadd.f32 %v640, %v654
        %v657 = vadd.f32 %v641, %v655
        %v658 = vld [vmem:[%s414] sm:$0xf]
        %v659 = vld [vmem:[%s414 + $0x4] sm:$0xf]
        %v660 = vld [vmem:[%s414 + $0x8] sm:$0xf]
        %v661 = vld [vmem:[%s414 + $0xc] sm:$0xf]
        %v662 = vld [vmem:[%s414 + $0x10] sm:$0xf]
        %v663 = vld [vmem:[%s414 + $0x14] sm:$0xf]
        %v664 = vld [vmem:[%s414 + $0x18] sm:$0xf]
        %v665 = vld [vmem:[%s414 + $0x1c] sm:$0xf]
        %v666 = vld [vmem:[%s414 + $0x20] sm:$0xf]
        %v667 = vld [vmem:[%s414 + $0x24] sm:$0xf]
        %v668 = vld [vmem:[%s414 + $0x28] sm:$0xf]
        %v669 = vld [vmem:[%s414 + $0x2c] sm:$0xf]
        %v670 = vld [vmem:[%s414 + $0x30] sm:$0xf]
        %v671 = vld [vmem:[%s414 + $0x34] sm:$0xf]
        %v672 = vld [vmem:[%s414 + $0x38] sm:$0xf]
        %v673 = vld [vmem:[%s414 + $0x3c] sm:$0xf]
        %v674 = vld [vmem:[%s414 + $0x40] sm:$0xf]
        %v675 = vld [vmem:[%s414 + $0x44] sm:$0xf]
        %v676 = vld [vmem:[%s414 + $0x48] sm:$0xf]
        %v677 = vld [vmem:[%s414 + $0x4c] sm:$0xf]
        %v678 = vld [vmem:[%s414 + $0x50] sm:$0xf]
        %v679 = vld [vmem:[%s414 + $0x54] sm:$0xf]
        %v680 = vld [vmem:[%s414 + $0x58] sm:$0xf]
        %v681 = vld [vmem:[%s414 + $0x5c] sm:$0xf]
        %v682 = vld [vmem:[%s414 + $0x60] sm:$0xf]
        %v683 = vld [vmem:[%s414 + $0x64] sm:$0xf]
        %v684 = vld [vmem:[%s414 + $0x68] sm:$0xf]
        %v685 = vld [vmem:[%s414 + $0x6c] sm:$0xf]
        %v686 = vld [vmem:[%s414 + $0x70] sm:$0xf]
        %v687 = vld [vmem:[%s414 + $0x74] sm:$0xf]
        %v688 = vld [vmem:[%s414 + $0x78] sm:$0xf]
        %v689 = vld [vmem:[%s414 + $0x7c] sm:$0xf]
        %v690 = vld [vmem:[#allocation2] sm:$0xff]
        %v691 = vpack.c.bf16 %v656, %v656
        %v692 = vpack.c.bf16 %v657, %v657
        %v725 = vunpack.c.l.b16 %v658
        %v726 = vunpack.c.l.b16 %v659
        %v727 = vunpack.c.l.b16 %v660
        %v728 = vunpack.c.l.b16 %v661
        %v729 = vunpack.c.l.b16 %v662
        %v730 = vunpack.c.l.b16 %v663
        %v731 = vunpack.c.l.b16 %v664
        %v732 = vunpack.c.l.b16 %v665
        %v733 = vunpack.c.l.b16 %v666
        %v734 = vunpack.c.l.b16 %v667
        %v735 = vunpack.c.l.b16 %v668
        %v736 = vunpack.c.l.b16 %v669
        %v737 = vunpack.c.l.b16 %v670
        %v738 = vunpack.c.l.b16 %v671
        %v739 = vunpack.c.l.b16 %v672
        %v740 = vunpack.c.l.b16 %v673
        %v741 = vunpack.c.l.b16 %v674
        %v742 = vunpack.c.l.b16 %v675
        %v743 = vunpack.c.l.b16 %v676
        %v744 = vunpack.c.l.b16 %v677
        %v745 = vunpack.c.l.b16 %v678
        %v746 = vunpack.c.l.b16 %v679
        %v747 = vunpack.c.l.b16 %v680
        %v748 = vunpack.c.l.b16 %v681
        %v749 = vunpack.c.l.b16 %v682
        %v750 = vunpack.c.l.b16 %v683
        %v751 = vunpack.c.l.b16 %v684
        %v752 = vunpack.c.l.b16 %v685
        %v753 = vunpack.c.l.b16 %v686
        %v754 = vunpack.c.l.b16 %v687
        %v755 = vunpack.c.l.b16 %v688
        %v756 = vunpack.c.l.b16 %v689
        %v757 = vpack.c.b16 %v726, %v725
        %v758 = vpack.c.b16 %v728, %v727
        %v759 = vpack.c.b16 %v730, %v729
        %v760 = vpack.c.b16 %v732, %v731
        %v761 = vpack.c.b16 %v734, %v733
        %v762 = vpack.c.b16 %v736, %v735
        %v763 = vpack.c.b16 %v738, %v737
        %v764 = vpack.c.b16 %v740, %v739
        %v765 = vpack.c.b16 %v742, %v741
        %v766 = vpack.c.b16 %v744, %v743
        %v767 = vpack.c.b16 %v746, %v745
        %v768 = vpack.c.b16 %v748, %v747
        %v769 = vpack.c.b16 %v750, %v749
        %v770 = vpack.c.b16 %v752, %v751
        %v771 = vpack.c.b16 %v754, %v753
        %v772 = vpack.c.b16 %v756, %v755
        %789 = vmatprep.subr.bf16.mxu0 0
        %790 = vmatpush1.bf16.msra.mxu0 %v757
        %791 = vmatprep.subr.bf16.mxu0 0
        %792 = vmatpush1.bf16.msra.mxu0 %v758
        %793 = vmatprep.subr.bf16.mxu0 0
        %794 = vmatpush1.bf16.msra.mxu0 %v759
        %795 = vmatprep.subr.bf16.mxu0 0
        %796 = vmatpush1.bf16.msra.mxu0 %v760
        %797 = vmatprep.subr.bf16.mxu0 0
        %798 = vmatpush1.bf16.msra.mxu0 %v761
        %799 = vmatprep.subr.bf16.mxu0 0
        %800 = vmatpush1.bf16.msra.mxu0 %v762
        %801 = vmatprep.subr.bf16.mxu0 0
        %802 = vmatpush1.bf16.msra.mxu0 %v763
        %803 = vmatprep.subr.bf16.mxu0 0
        %804 = vmatpush1.bf16.msra.mxu0 %v764
        %805 = vmatprep.subr.bf16.mxu0 0
        %806 = vmatpush1.bf16.msra.mxu0 %v765
        %807 = vmatprep.subr.bf16.mxu0 0
        %808 = vmatpush1.bf16.msra.mxu0 %v766
        %809 = vmatprep.subr.bf16.mxu0 0
        %810 = vmatpush1.bf16.msra.mxu0 %v767
        %811 = vmatprep.subr.bf16.mxu0 0
        %812 = vmatpush1.bf16.msra.mxu0 %v768
        %813 = vmatprep.subr.bf16.mxu0 0
        %814 = vmatpush1.bf16.msra.mxu0 %v769
        %815 = vmatprep.subr.bf16.mxu0 0
        %816 = vmatpush1.bf16.msra.mxu0 %v770
        %817 = vmatprep.subr.bf16.mxu0 0
        %818 = vmatpush1.bf16.msra.mxu0 %v771
        %819 = vmatprep.subr.bf16.mxu0 0
        %820 = vmatpush1.bf16.msra.mxu0 %v772
        %821 = vmatprep.mubr.bf16.mxu0 %v692
        %822 = vmatmul.mubr.bf16.gmra.mrb[0].mxu0 %v691
        %v823 = vpop.f32.mrb[0].mxu0
        %v824 = vadd.f32 0.0, %v823
        %v825 = vpop.f32.mrb[0].mxu0
        %v826 = vpop.f32.mrb[0].mxu0
        %v827 = vpop.f32.mrb[0].mxu0
        %828 = vdwg.mxu0
        %v829 = vadd.f32 %v690, %v824
        %830 = vst.msk [vmem:[#allocation2] sm:$0xff] %vm452, %v829
        %p831 = scmp.eq.s32.totalorder %s29, 1
        %p832 = pnand %p831, %p435
        %p833 = pneg %p832
        // Predicated region
        $region53: #{tpu_custom_call.1} parent=47 // pred_check
          _
        $region54: #{tpu_custom_call.1} parent=47 // pred_check_branch
          %835 = sbr.rel (%p832) target = $region56
        $region55: #{tpu_custom_call.1} parent=47 // pred_region
          %v836 = vld [vmem:[#allocation2] sm:$0xff]
          %v837 = vpack.c.bf16 %v836, %v836
          %v838 = vld [vmem:[%s5] sm:$0xf]
          %v839 = vld [vmem:[%s5 + $0x4] sm:$0xf]
          %v840 = vld [vmem:[%s5 + $0x8] sm:$0xf]
          %v841 = vld [vmem:[%s5 + $0xc] sm:$0xf]
          %v842 = vld [vmem:[%s6] sm:$0x1]
          %v844 = vlaneseq
          %v845 = vshrl.u32 %v844, 7
          %v846 = vsub.s32 0, %v845
          %v847 = vrot.slane %v842, %v846
          %v853 = vunpack.c.l.b16 %v838
          %v854 = vunpack.c.l.b16 %v839
          %v855 = vunpack.c.l.b16 %v840
          %v856 = vunpack.c.l.b16 %v841
          %v857 = vpack.c.b16 %v854, %v853
          %v858 = vpack.c.b16 %v856, %v855
          %v862 = vsel %vm452, %v837, 0
          %864 = vmatprep.subr.bf16.mxu0 0
          %865 = vmatpush1.bf16.msra.mxu0 %v857
          %866 = vmatprep.subr.bf16.mxu0 0
          %867 = vmatpush1.bf16.msra.mxu0 %v858
          %868 = vmatprep.subr.bf16.mxu0 0
          %869 = vmatpush1.bf16.msra.mxu0 0
          %870 = vmatprep.subr.bf16.mxu0 0
          %871 = vmatpush1.bf16.msra.mxu0 0
          %872 = vmatprep.subr.bf16.mxu0 0
          %873 = vmatpush1.bf16.msra.mxu0 0
          %874 = vmatprep.subr.bf16.mxu0 0
          %875 = vmatpush1.bf16.msra.mxu0 0
          %876 = vmatprep.subr.bf16.mxu0 0
          %877 = vmatpush1.bf16.msra.mxu0 0
          %878 = vmatprep.subr.bf16.mxu0 0
          %879 = vmatpush1.bf16.msra.mxu0 0
          %880 = vmatprep.subr.bf16.mxu0 0
          %881 = vmatpush1.bf16.msra.mxu0 0
          %882 = vmatprep.subr.bf16.mxu0 0
          %883 = vmatpush1.bf16.msra.mxu0 0
          %884 = vmatprep.subr.bf16.mxu0 0
          %885 = vmatpush1.bf16.msra.mxu0 0
          %886 = vmatprep.subr.bf16.mxu0 0
          %887 = vmatpush1.bf16.msra.mxu0 0
          %888 = vmatprep.subr.bf16.mxu0 0
          %889 = vmatpush1.bf16.msra.mxu0 0
          %890 = vmatprep.subr.bf16.mxu0 0
          %891 = vmatpush1.bf16.msra.mxu0 0
          %892 = vmatprep.subr.bf16.mxu0 0
          %893 = vmatpush1.bf16.msra.mxu0 0
          %894 = vmatprep.subr.bf16.mxu0 0
          %895 = vmatpush1.bf16.msra.mxu0 0
          %896 = vmatprep.mubr.bf16.mxu0 0
          %897 = vmatmul.mubr.bf16.gmra.mrb[0].mxu0 %v862
          %v898 = vpop.f32.mrb[0].mxu0
          %v899 = vadd.f32 %v847, %v898
          %v900 = vpop.f32.mrb[0].mxu0
          %v901 = vpop.f32.mrb[0].mxu0
          %v902 = vpop.f32.mrb[0].mxu0
          %903 = vdwg.mxu0
          %904 = vst.msk [vmem:[%s394] sm:$0xff] %vm452, %v899
        $region56: #{tpu_custom_call.1} parent=47 // pred_fallthru
          _
        %s905 = sand.u32 %s239, 1
        %s906 = scalar_lea.sflag [#allocation4], %s905
        %s907 = sand.u32 %s239, 1
        %s908 = smul.addr %s907, 8
        %s909 = scalar_lea.vmem [#allocation3], %s908
        // Predicated region
        $region57: #{tpu_custom_call.1} parent=47 // pred_check
          %p910 = pneg %p249
        $region58: #{tpu_custom_call.1} parent=47 // pred_check_branch
          %912 = sbr.rel (%p910) target = $region60
        $region59: #{tpu_custom_call.1} parent=47 // pred_region
          %s914 = ssub.s32 128, 128
          %915 = vsyncadd %s906, %s914
          %s916 = sadd.s32 %s28, %s27
          %s917 = smul.addr %s916, 128
          %s918 = scalar_lea.hbm %s7, %s917
          %s920 = sshll.u32 %s909, 4
          %s921 = int_to_ptr.vmem [resolvable:$true] %s920
          %923 = dma.vmem_to_hbm [thread:$0]  %s921, 128, %s918, %s906
        $region60: #{tpu_custom_call.1} parent=47 // pred_fallthru
          _
      $region48: #{tpu_custom_call.1} parent=5 // pred_fallthru
        _
      %p924 = scmp.le.s32.totalorder 2, %s16
      // Predicated region
      $region61: #{tpu_custom_call.1} parent=5 // pred_check
        %p925 = pneg %p924
      $region62: #{tpu_custom_call.1} parent=5 // pred_check_branch
        %927 = sbr.rel (%p925) target = $region64
      $region63: #{tpu_custom_call.1} parent=5 // pred_region
        %s928 = ssub.s32 %s16, 2
        // Predicated region
        $region65: #{tpu_custom_call.1} parent=63 // pred_check
          %p929 = pneg %p255
        $region66: #{tpu_custom_call.1} parent=63 // pred_check_branch
          %931 = sbr.rel (%p929) target = $region68
        $region67: #{tpu_custom_call.1} parent=63 // pred_region
          %s932 = sand.u32 %s240, 1
          %s933 = scalar_lea.sflag [#allocation4], %s932
          %s934 = sand.u32 %s240, 1
          %s935 = smul.addr %s934, 8
          %s936 = scalar_lea.vmem [#allocation3], %s935
          %937 = dma.done %s933, 128
        $region68: #{tpu_custom_call.1} parent=63 // pred_fallthru
          _
      $region64: #{tpu_custom_call.1} parent=5 // pred_fallthru
        _
    $region6: #{tpu_custom_call.1} parent=1 // loop_footer
      %s20 = sadd.s32 1, %s16
    $region7: #{tpu_custom_call.1} parent=1 // loop_footer_branch
      %15 = sbr.rel target = $region3
    $region8: #{tpu_custom_call.1} parent=1 // loop_exit
      _
    %938 = vsyncpa [#allocation4], 1
    %s939 = scalar_lea.sflag [#allocation4], 1
    %940 = vsyncpa %s939, 1

</llo_original>
